<compile_context>
chip_gen: v7x
topology: tpu7x:2x2x1
jax: 0.10.0
libtpu: 0.0.40
codegen_flags: <defaults>
</compile_context>

<pallas_src>
import functools

import jax
import jax.numpy as jnp
from jax.experimental import pallas as pl
from jax.experimental.pallas import tpu as pltpu


def _cdiv(a, b):
    return (a + b - 1) // b


def _round_up(x, m):
    return _cdiv(x, m) * m


def _round_down(x, m):
    return (x // m) * m


def _default_target_block_bytes():
    """Per-generation input-block budget (HBM-bound: bigger blocks on faster HBM)."""
    try:
        kind = jax.devices()[0].device_kind.lower()
    except Exception:
        kind = ""
    if "v7" in kind or "tpu7" in kind:
        return 12 * 1024 * 1024     # ~3.2 TB/s HBM, 64 MiB VMEM: big blocks, small per-step tax
    if "v5e" in kind or "v5 lite" in kind or "v5lite" in kind:
        return 4 * 1024 * 1024      # ~0.8 TB/s HBM: 4 MiB already keeps overhead <7%
    return 8 * 1024 * 1024          # v6e-class default


def _gap_single_step_kernel(x_ref, o_ref, *, inv_hw):
    # x_ref: (row_tile, hw)   o_ref: (1, 1, row_tile)  (lane-dense output)
    s = jnp.sum(x_ref[...], axis=-1, keepdims=True, dtype=jnp.float32)   # (row_tile, 1)
    s = s.reshape(1, -1) * inv_hw                                        # -> (1, row_tile)
    o_ref[...] = s.astype(o_ref.dtype).reshape(o_ref.shape)


def _gap_multi_step_kernel(x_ref, o_ref, acc_ref, *, inv_hw, hw, hw_block):
    # x_ref: (row_tile, hw_block)  o_ref: (1, 1, row_tile)  acc_ref: (1, row_tile) f32
    k = pl.program_id(1)

    @pl.when(k == 0)
    def _():
        acc_ref[...] = jnp.zeros_like(acc_ref)

    x = x_ref[...]
    if hw % hw_block != 0:
        # Ragged spatial tail: out-of-range lanes would corrupt real row sums -> zero them.
        col = jax.lax.broadcasted_iota(jnp.int32, x.shape, 1)
        x = jnp.where(col < (hw - k * hw_block), x, jnp.zeros_like(x))

    s = jnp.sum(x, axis=-1, keepdims=True, dtype=jnp.float32)            # (row_tile, 1)
    acc_ref[...] += s.reshape(1, -1)

    @pl.when(k == pl.num_programs(1) - 1)
    def _():
        o_ref[...] = (acc_ref[...] * inv_hw).astype(o_ref.dtype).reshape(o_ref.shape)


def global_average_pooling(feat, *, target_block_bytes=None):
    """feat: (N, C, H, W) -> (N, C); mean over spatial dims (matches F.avg_pool2d + view)."""
    N, C, H, W = feat.shape
    rows, hw = N * C, H * W
    dtype = feat.dtype
    itemsize = jnp.dtype(dtype).itemsize
    if target_block_bytes is None:
        target_block_bytes = _default_target_block_bytes()
    target_block_bytes = int(target_block_bytes)

    x2d = feat.reshape(rows, hw)                 # free row-major collapse: no copy, no padding

    sublane = max(8, 32 // max(itemsize, 1))     # 8 (f32) / 16 (bf16) / 32 (int8, fp8)
    lane_hw = _round_up(hw, 128)                 # lane-padded spatial width as seen by VMEM

    # ---- spatial (reduction-axis) tiling -----------------------------------
    if sublane * lane_hw * itemsize <= target_block_bytes:
        hw_block = hw                            # full extent: always a legal last block dim
    else:
        rt_probe = min(_round_up(rows, sublane), 128)
        hw_block = _round_down(target_block_bytes // (rt_probe * itemsize), 128)
        hw_block = max(128, hw_block)
        if hw_block >= hw:                       # tiny-budget corner case: fall back to full hw
            hw_block = hw
    single_step = hw_block == hw

    # ---- row tiling: fixed tile + cdiv grid (robust for any N*C) -----------
    if single_step:
        row_tile = max(sublane, target_block_bytes // (lane_hw * itemsize))
        row_tile = (_round_down(row_tile, 128) if row_tile >= 128
                    else _round_down(row_tile, sublane))
        row_tile = max(sublane, min(row_tile, _round_up(rows, sublane)))
    else:
        row_tile = min(_round_up(rows, sublane), 128)

    num_row_blocks = _cdiv(rows, row_tile)
    if num_row_blocks == 1 and rows >= 256:
        # v7x megacore: keep >= 2 blocks on the "parallel" row axis so both TCs stream HBM.
        row_tile = _round_up(_cdiv(rows, 2), sublane)
        num_row_blocks = _cdiv(rows, row_tile)

    num_hw_blocks = _cdiv(hw, hw_block)
    inv_hw = 1.0 / float(hw)

    out_shape = jax.ShapeDtypeStruct((num_row_blocks, 1, row_tile), dtype)
    cost = pl.CostEstimate(
        flops=rows * hw,
        transcendentals=0,
        bytes_accessed=rows * hw * itemsize + rows * itemsize,
    )

    if single_step:
        kernel = functools.partial(_gap_single_step_kernel, inv_hw=inv_hw)
        grid_spec = pltpu.PrefetchScalarGridSpec(
            num_scalar_prefetch=0,
            grid=(num_row_blocks,),
            in_specs=[pl.BlockSpec((row_tile, hw), lambda i: (i, 0))],
            out_specs=pl.BlockSpec((1, 1, row_tile), lambda i: (i, 0, 0)),
        )
        dim_sem = ("parallel",)
    else:
        kernel = functools.partial(_gap_multi_step_kernel,
                                   inv_hw=inv_hw, hw=hw, hw_block=hw_block)
        grid_spec = pltpu.PrefetchScalarGridSpec(
            num_scalar_prefetch=0,
            grid=(num_row_blocks, num_hw_blocks),            # reduction axis last
            in_specs=[pl.BlockSpec((row_tile, hw_block), lambda i, k: (i, k))],
            out_specs=pl.BlockSpec((1, 1, row_tile), lambda i, k: (i, 0, 0)),
            scratch_shapes=[pltpu.VMEM((1, row_tile), jnp.float32)],
        )
        dim_sem = ("parallel", "arbitrary")

    vmem_limit = int(min(48 * 1024 * 1024,
                         max(32 * 1024 * 1024, 2 * target_block_bytes + 8 * 1024 * 1024)))

    out = pl.pallas_call(
        kernel,
        out_shape=out_shape,
        grid_spec=grid_spec,
        compiler_params=pltpu.CompilerParams(
            dimension_semantics=dim_sem,
            vmem_limit_bytes=vmem_limit,
        ),
        cost_estimate=cost,
    )(x2d)

    flat = out.reshape(num_row_blocks * row_tile)
    if num_row_blocks * row_tile != rows:
        flat = flat[:rows]                       # drop sums of padded/ragged tail rows
    return flat.reshape(N, C)


if __name__ == "__main__":
    key = jax.random.PRNGKey(0)
    k1, k2, k3, k4, k5, k6 = jax.random.split(key, 6)

    def ref_gap(x):
        return jnp.mean(x.astype(jnp.float32), axis=(2, 3)).reshape(-1, x.shape[1])

    # 1) spec-sized input: single-step path, single block
    x1 = jax.random.normal(k1, (2, 4, 16, 16), dtype=jnp.float32)
    y1 = jax.block_until_ready(global_average_pooling(x1))
    assert y1.shape == (2, 4), y1.shape
    assert jnp.allclose(y1, ref_gap(x1), atol=1e-5, rtol=1e-5)

    # 2) 128 rows: single-step, full 128-row tile
    x2 = jax.random.normal(k2, (2, 64, 16, 16), dtype=jnp.float32)
    y2 = jax.block_until_ready(global_average_pooling(x2))
    assert jnp.allclose(y2, ref_gap(x2), atol=1e-5, rtol=1e-5)

    # 3) ragged N*C (=300): cdiv row grid, >=2 "parallel" blocks, tail rows discarded
    x3 = jax.random.normal(k3, (3, 100, 16, 16), dtype=jnp.float32)
    y3 = jax.block_until_ready(global_average_pooling(x3))
    assert y3.shape == (3, 100), y3.shape
    assert jnp.allclose(y3, ref_gap(x3), atol=1e-5, rtol=1e-5)

    # 4) forced multi-step reduction (H*W % 128 == 0): f32 VMEM accumulator path
    x4 = jax.random.normal(k4, (1, 8, 64, 512), dtype=jnp.float32)
    y4 = jax.block_until_ready(global_average_pooling(x4, target_block_bytes=64 * 1024))
    assert jnp.allclose(y4, ref_gap(x4), atol=1e-4, rtol=1e-4)

    # 5) multi-step with ragged spatial tail (H*W = 2500): in-kernel lane masking
    x5 = jax.random.normal(k5, (1, 8, 50, 50), dtype=jnp.float32)
    y5 = jax.block_until_ready(global_average_pooling(x5, target_block_bytes=16 * 1024))
    assert jnp.allclose(y5, ref_gap(x5), atol=1e-4, rtol=1e-4)

    # 6) bf16 input: f32 accumulation, dtype-aware sublane packing
    x6 = jax.random.normal(k6, (2, 64, 16, 16), dtype=jnp.bfloat16)
    y6 = jax.block_until_ready(global_average_pooling(x6))
    assert jnp.allclose(y6.astype(jnp.float32), ref_gap(x6), atol=1e-2, rtol=1e-2)

    print("KERNEL_OK")
</pallas_src>

<mosaic_0001>
module attributes {stable_mosaic.version = 11 : i64} {
  func.func @_gap_single_step_kernel(%arg0: i32, %arg1: memref<8x256xf32, #tpu.memory_space<vmem>>, %arg2: memref<1x1x8xf32, #tpu.memory_space<vmem>>) attributes {dimension_semantics = [#tpu.dimension_semantics<parallel>], iteration_bounds = array<i64: 1>, scalar_prefetch = 0 : i64, scratch_operands = 0 : i64, tpu.core_type = #tpu.core_type<tc>, window_params = [{transform_indices = @transform_0, window_bounds = array<i64: 8, 256>}, {transform_indices = @transform_1, window_bounds = array<i64: 1, 1, 8>}]} {
    %c0 = arith.constant 0 : index
    %c0_0 = arith.constant 0 : index
    %0 = vector.load %arg1[%c0, %c0_0] : memref<8x256xf32, #tpu.memory_space<vmem>>, vector<8x256xf32>
    %cst = arith.constant dense<0.000000e+00> : vector<8xf32>
    %1 = vector.multi_reduction <add>, %0, %cst [1] : vector<8x256xf32> to vector<8xf32>
    %2 = vector.shape_cast %1 : vector<8xf32> to vector<8x1xf32>
    %3 = vector.shape_cast %2 : vector<8x1xf32> to vector<1x8xf32>
    %cst_1 = arith.constant 3.906250e-03 : f32
    %4 = vector.broadcast %cst_1 : f32 to vector<1x8xf32>
    %5 = arith.mulf %3, %4 : vector<1x8xf32>
    %6 = vector.shape_cast %5 : vector<1x8xf32> to vector<1x1x8xf32>
    %c0_2 = arith.constant 0 : index
    %c0_3 = arith.constant 0 : index
    %c0_4 = arith.constant 0 : index
    %7 = vector.load %arg2[%c0_2, %c0_3, %c0_4] : memref<1x1x8xf32, #tpu.memory_space<vmem>>, vector<1x1x8xf32>
    tpu.vector_store %arg2[%c0_2, %c0_3, %c0_4], %6 {strides = array<i32>} : memref<1x1x8xf32, #tpu.memory_space<vmem>>, vector<1x1x8xf32>,
    return
  }
  func.func @transform_0(%arg0: i32) -> (i32, i32) {
    %c0_i32 = arith.constant 0 : i32
    %c0_i32_0 = arith.constant 0 : i32
    return %arg0, %c0_i32 : i32, i32
  }
  func.func @transform_1(%arg0: i32) -> (i32, i32, i32) {
    %c0_i32 = arith.constant 0 : i32
    %c0_i32_0 = arith.constant 0 : i32
    %c0_i32_1 = arith.constant 0 : i32
    return %arg0, %c0_i32, %c0_i32_0 : i32, i32, i32
  }
}

</mosaic_0001>

<llo_original>
// kernel: tpu_custom_call.1
$region0: #{tpu_custom_call.1}
  #allocation0 [shape = 'u32[]', space=smem, size = 0x4, offset = 0x4, fixed_abs, tag = 'smem constant byte address 0x4 - core index']
  #allocation1 [shape = 'u32[144,128]{1,0:T(1,128)}', space=vmem, size = 0x12000, scoped, tag = 'internal scratch']
  %s0 = inlined_call_operand.hbm [shape: f32[8,256], index: 0, kind: input, shape index: {}]
  %s1 = inlined_call_operand.hbm [shape: f32[1,1,8], index: 1, kind: output, shape index: {}]
  %s2 = sld [smem:[#allocation0]]
  $region18: #{tpu_custom_call.1} parent=0
    _
  %s4 = ssub.s32 1, %s2
  %s5 = scalar_select 0, %s4, %s2
  $region1: #{tpu_custom_call.1} parent=0
    #allocation2 [shape = 'u8[8192]{0}', space=vmem, size = 0x2000, scoped, tag = 'input window, operand 0, single buffered']
    #allocation3 [shape = 's32[1]{0}', space=sflag, size = 0x4, scoped, tag = 'scoped memory for tpu_custom_call.1']
    #allocation4 [shape = 's32[1]{0}', space=sflag, size = 0x4, scoped, tag = 'scoped memory for tpu_custom_call.1']
    #allocation5 [shape = 'u8[512]{0}', space=vmem, size = 0x400, scoped, tag = 'output window, operand 0, single buffered']
    %6 = vsyncpa [#allocation3], 0
    %7 = vsyncpa [#allocation4], 0
    // Predicated region
    $region2: #{tpu_custom_call.1} parent=1 // pred_check
      _
    $region3: #{tpu_custom_call.1} parent=1 // pred_check_branch
      %9 = sbr.rel (0) target = $region5
    $region4: #{tpu_custom_call.1} parent=1 // pred_region
      %s11 = ssub.s32 256, 256
      %12 = vsyncadd [#allocation3], %s11
      %s14 = sshll.u32 [#allocation2], 4
      %s15 = int_to_ptr.vmem [resolvable:$true] %s14
      %17 = dma.hbm_to_vmem [thread:$0]  %s0, 256, %s15, [#allocation3]
    $region5: #{tpu_custom_call.1} parent=1 // pred_fallthru
      _
    // Predicated region
    $region6: #{tpu_custom_call.1} parent=1 // pred_check
      _
    $region7: #{tpu_custom_call.1} parent=1 // pred_check_branch
      %19 = sbr.rel (0) target = $region9
    $region8: #{tpu_custom_call.1} parent=1 // pred_region
      %20 = dma.done [#allocation3], 256
    $region9: #{tpu_custom_call.1} parent=1 // pred_fallthru
      _
    %v21 = vld [vmem:[#allocation2] sm:$0xff]
    %v22 = vld [vmem:[#allocation2 + $0x8] sm:$0xff]
    %v23 = vadd.f32 %v21, %v22
    %24 = vadd.xlane.f32.xlu0 %v23
    %v25 = vpop.xlane.xlu0 %24
    %v26 = vmul.f32 %v25, 0.00390625
    %v28 = vlaneseq
    %v29 = vand.u32 %v28, 127
    %v30 = vlaneseq
    %v31 = vshrl.u32 %v30, 7
    %v32 = vsub.s32 %v29, %v31
    %v33 = vrot.slane %v26, %v32
    %vm35 = vcmask 57344
    %36 = vst.msk [vmem:[#allocation5] sm:$0x1] %vm35, %v33
    // Predicated region
    $region10: #{tpu_custom_call.1} parent=1 // pred_check
      _
    $region11: #{tpu_custom_call.1} parent=1 // pred_check_branch
      %38 = sbr.rel (0) target = $region13
    $region12: #{tpu_custom_call.1} parent=1 // pred_region
      %s40 = ssub.s32 16, 16
      %41 = vsyncadd [#allocation4], %s40
      %s43 = sshll.u32 [#allocation5], 4
      %s44 = int_to_ptr.vmem [resolvable:$true] %s43
      %46 = dma.vmem_to_hbm [thread:$0]  %s44, 16, %s1, [#allocation4]
    $region13: #{tpu_custom_call.1} parent=1 // pred_fallthru
      _
    // Predicated region
    $region14: #{tpu_custom_call.1} parent=1 // pred_check
      _
    $region15: #{tpu_custom_call.1} parent=1 // pred_check_branch
      %48 = sbr.rel (0) target = $region17
    $region16: #{tpu_custom_call.1} parent=1 // pred_region
      %49 = dma.done [#allocation4], 16
    $region17: #{tpu_custom_call.1} parent=1 // pred_fallthru
      _
    %50 = vsyncpa [#allocation3], 1
    %51 = vsyncpa [#allocation4], 1

</llo_original>
